<compile_context>
chip_gen: v7x
topology: tpu7x:2x2x1
jax: 0.10.0
libtpu: 0.0.40
codegen_flags: <defaults>
</compile_context>

<pallas_src>
import jax
import jax.numpy as jnp
from jax import lax
from jax.experimental import pallas as pl
from jax.experimental.pallas import tpu as pltpu


# ----------------------------------------------------------------------------
# Pallas kernel: separable 3x3 binomial blur with an in-kernel zero halo.
# Input block (tile, H, W) -> output block (tile, H, W).
# ----------------------------------------------------------------------------
def _blur_kernel(x_ref, o_ref):
    x = x_ref[...]                                      # (tile, H, W)
    t, h, w = x.shape

    # Horizontal pass [1, 2, 1] with a zero boundary (lane axis).
    zcol = jnp.zeros((t, h, 1), x.dtype)
    x_jm1 = jnp.concatenate([zcol, x[:, :, : w - 1]], axis=2)   # x[:, :, j-1]
    x_jp1 = jnp.concatenate([x[:, :, 1:], zcol], axis=2)        # x[:, :, j+1]
    hh = x_jm1 + 2.0 * x + x_jp1                                 # (tile, H, W)

    # Vertical pass [1, 2, 1] with a zero boundary (sublane axis).
    zrow = jnp.zeros((t, 1, w), x.dtype)
    h_im1 = jnp.concatenate([zrow, hh[:, : h - 1, :]], axis=1)  # hh[:, i-1, :]
    h_ip1 = jnp.concatenate([hh[:, 1:, :], zrow], axis=1)       # hh[:, i+1, :]
    v = h_im1 + 2.0 * hh + h_ip1                                 # (tile, H, W)

    o_ref[...] = (v * (1.0 / 16.0)).astype(o_ref.dtype)


# ----------------------------------------------------------------------------
# Wrapper: layout plumbing + tiling heuristics + pallas_call.
# ----------------------------------------------------------------------------
def _round_up(n, m):
    return ((n + m - 1) // m) * m


def _vmem_capacity_bytes():
    # Trace-time hardware query; fall back to the most conservative (v7x
    # per-TensorCore) capacity if it is unavailable.
    try:
        return int(pltpu.get_tpu_info().vmem_capacity_bytes)
    except Exception:
        return 64 * 1024 * 1024


def blur(x):
    """Depthwise 3x3 binomial blur, padding=1.  x: (B, C, H, W) float32 NCHW."""
    B, C, H, W = x.shape
    BC = B * C
    dtype = x.dtype
    itemsize = jnp.dtype(dtype).itemsize

    # Fuse batch & channel: depthwise => every (H, W) plane is independent.
    # This reshape only merges leading dims (no data movement).
    xr = x.reshape(BC, H, W)

    # --- per-generation VMEM budget -------------------------------------
    vmem_cap = _vmem_capacity_bytes()
    if vmem_cap >= 100 * 1024 * 1024:      # v5e / v6e: 128 MiB per TensorCore
        budget = 10 * 1024 * 1024          # per buffer-set budget
        vmem_limit = 64 * 1024 * 1024
    else:                                  # v7x: 64 MiB per TensorCore
        budget = 5 * 1024 * 1024
        vmem_limit = 32 * 1024 * 1024

    # Honest per-plane footprint: (8,128) layout padding, input + output
    # blocks double-buffered by the pipeline, plus ~3 planes of live
    # intermediates (shifted copies / h / v) inside the kernel body.
    plane_bytes = _round_up(H, 8) * _round_up(W, 128) * itemsize
    bytes_per_plane = (2 + 2 + 3) * plane_bytes
    max_tile = max(1, budget // bytes_per_plane)

    # Grid: biggest tile that fits the budget; request >= 2 steps (pipeline
    # overlap) and an even step count (v7x has 2 TensorCores; v5e/v6e are
    # unaffected beyond a slightly smaller tile).
    min_steps = 2 if BC >= 2 else 1
    grid_n = max(min_steps, pl.cdiv(BC, max_tile))
    if grid_n > 1 and grid_n % 2 != 0:
        grid_n += 1
    grid_n = min(grid_n, BC)
    tile = pl.cdiv(BC, grid_n)
    grid_n = pl.cdiv(BC, tile)             # drop empty trailing steps

    cost = pl.CostEstimate(
        flops=9 * BC * H * W,
        transcendentals=0,
        bytes_accessed=2 * BC * H * W * itemsize,
    )

    out = pl.pallas_call(
        _blur_kernel,
        out_shape=jax.ShapeDtypeStruct((BC, H, W), dtype),
        grid_spec=pltpu.PrefetchScalarGridSpec(
            num_scalar_prefetch=0,
            grid=(grid_n,),
            in_specs=[pl.BlockSpec((tile, H, W), lambda i: (i, 0, 0))],
            out_specs=pl.BlockSpec((tile, H, W), lambda i: (i, 0, 0)),
        ),
        compiler_params=pltpu.CompilerParams(
            dimension_semantics=("parallel",),
            vmem_limit_bytes=vmem_limit,
        ),
        cost_estimate=cost,
    )(xr)

    return out.reshape(B, C, H, W)


# ----------------------------------------------------------------------------
# Pure-JAX reference (matches F.conv2d(input, weight, padding=1, groups=C)).
# ----------------------------------------------------------------------------
def blur_ref(x):
    B, C, H, W = x.shape
    k = jnp.array([[1.0, 2.0, 1.0],
                   [2.0, 4.0, 2.0],
                   [1.0, 2.0, 1.0]], dtype=jnp.float32)
    k = k / k.sum()
    kernel = jnp.broadcast_to(k, (C, 1, 3, 3))
    return lax.conv_general_dilated(
        x, kernel,
        window_strides=(1, 1),
        padding=[(1, 1), (1, 1)],
        dimension_numbers=("NCHW", "OIHW", "NCHW"),
        feature_group_count=C,
    )


if __name__ == "__main__":
    # Module config: Blur(channel=4) on a (2, 4, 16, 16) input.
    B, C, H, W = 2, 4, 16, 16

    key = jax.random.PRNGKey(0)
    x = jax.random.normal(key, (B, C, H, W), dtype=jnp.float32)

    blur_jit = jax.jit(blur)
    out = blur_jit(x)
    out = jax.block_until_ready(out)

    ref = blur_ref(x)
    assert out.shape == ref.shape, (out.shape, ref.shape)
    assert jnp.allclose(out, ref, rtol=1e-5, atol=1e-5), float(
        jnp.max(jnp.abs(out - ref)))

    print("KERNEL_OK")
</pallas_src>

<mosaic_0001>
module attributes {stable_mosaic.version = 11 : i64} {
  func.func @_blur_kernel(%arg0: i32, %arg1: memref<4x16x16xf32, #tpu.memory_space<vmem>>, %arg2: memref<4x16x16xf32, #tpu.memory_space<vmem>>) attributes {dimension_semantics = [#tpu.dimension_semantics<parallel>], iteration_bounds = array<i64: 2>, scalar_prefetch = 0 : i64, scratch_operands = 0 : i64, tpu.core_type = #tpu.core_type<tc>, window_params = [{transform_indices = @transform_0, window_bounds = array<i64: 4, 16, 16>}, {transform_indices = @transform_1, window_bounds = array<i64: 4, 16, 16>}]} {
    %c0 = arith.constant 0 : index
    %c0_0 = arith.constant 0 : index
    %c0_1 = arith.constant 0 : index
    %0 = vector.load %arg1[%c0, %c0_0, %c0_1] : memref<4x16x16xf32, #tpu.memory_space<vmem>>, vector<4x16x16xf32>
    %cst = arith.constant 0.000000e+00 : f32
    %1 = vector.broadcast %cst : f32 to vector<4x16x1xf32>
    %2 = vector.extract_strided_slice %0 {offsets = [0, 0, 0], sizes = [4, 16, 15], strides = [1, 1, 1]} : vector<4x16x16xf32> to vector<4x16x15xf32>
    %3 = tpu.concatenate %1, %2 in 2 : vector<4x16x1xf32>, vector<4x16x15xf32> -> vector<4x16x16xf32>
    %4 = vector.extract_strided_slice %0 {offsets = [0, 0, 1], sizes = [4, 16, 15], strides = [1, 1, 1]} : vector<4x16x16xf32> to vector<4x16x15xf32>
    %5 = tpu.concatenate %4, %1 in 2 : vector<4x16x15xf32>, vector<4x16x1xf32> -> vector<4x16x16xf32>
    %cst_2 = arith.constant 2.000000e+00 : f32
    %6 = vector.broadcast %cst_2 : f32 to vector<4x16x16xf32>
    %7 = arith.mulf %6, %0 : vector<4x16x16xf32>
    %8 = arith.addf %3, %7 : vector<4x16x16xf32>
    %9 = arith.addf %8, %5 : vector<4x16x16xf32>
    %cst_3 = arith.constant 0.000000e+00 : f32
    %10 = vector.broadcast %cst_3 : f32 to vector<4x1x16xf32>
    %11 = vector.extract_strided_slice %9 {offsets = [0, 0, 0], sizes = [4, 15, 16], strides = [1, 1, 1]} : vector<4x16x16xf32> to vector<4x15x16xf32>
    %12 = tpu.concatenate %10, %11 in 1 : vector<4x1x16xf32>, vector<4x15x16xf32> -> vector<4x16x16xf32>
    %13 = vector.extract_strided_slice %9 {offsets = [0, 1, 0], sizes = [4, 15, 16], strides = [1, 1, 1]} : vector<4x16x16xf32> to vector<4x15x16xf32>
    %14 = tpu.concatenate %13, %10 in 1 : vector<4x15x16xf32>, vector<4x1x16xf32> -> vector<4x16x16xf32>
    %cst_4 = arith.constant 2.000000e+00 : f32
    %15 = vector.broadcast %cst_4 : f32 to vector<4x16x16xf32>
    %16 = arith.mulf %15, %9 : vector<4x16x16xf32>
    %17 = arith.addf %12, %16 : vector<4x16x16xf32>
    %18 = arith.addf %17, %14 : vector<4x16x16xf32>
    %cst_5 = arith.constant 6.250000e-02 : f32
    %19 = vector.broadcast %cst_5 : f32 to vector<4x16x16xf32>
    %20 = arith.mulf %18, %19 : vector<4x16x16xf32>
    %c0_6 = arith.constant 0 : index
    %c0_7 = arith.constant 0 : index
    %c0_8 = arith.constant 0 : index
    %21 = vector.load %arg2[%c0_6, %c0_7, %c0_8] : memref<4x16x16xf32, #tpu.memory_space<vmem>>, vector<4x16x16xf32>
    tpu.vector_store %arg2[%c0_6, %c0_7, %c0_8], %20 {strides = array<i32>} : memref<4x16x16xf32, #tpu.memory_space<vmem>>, vector<4x16x16xf32>,
    return
  }
  func.func @transform_0(%arg0: i32) -> (i32, i32, i32) {
    %c0_i32 = arith.constant 0 : i32
    %c0_i32_0 = arith.constant 0 : i32
    %c0_i32_1 = arith.constant 0 : i32
    return %arg0, %c0_i32, %c0_i32_0 : i32, i32, i32
  }
  func.func @transform_1(%arg0: i32) -> (i32, i32, i32) {
    %c0_i32 = arith.constant 0 : i32
    %c0_i32_0 = arith.constant 0 : i32
    %c0_i32_1 = arith.constant 0 : i32
    return %arg0, %c0_i32, %c0_i32_0 : i32, i32, i32
  }
}

</mosaic_0001>

<llo_original>
// kernel: blur.1
$region0: #{blur.1}
  #allocation0 [shape = 'u32[]', space=smem, size = 0x4, offset = 0x4, fixed_abs, tag = 'smem constant byte address 0x4 - core index']
  #allocation1 [shape = 'u32[144,128]{1,0:T(1,128)}', space=vmem, size = 0x12000, scoped, tag = 'internal scratch']
  %s0 = inlined_call_operand.hbm [shape: f32[8,16,16], index: 0, kind: input, shape index: {}]
  %s1 = inlined_call_operand.hbm [shape: f32[8,16,16], index: 1, kind: output, shape index: {}]
  %s2 = sld [smem:[#allocation0]]
  $region41: #{blur.1} parent=0
    _
  %s4 = ssub.s32 1, %s2
  %s5 = scalar_select 0, %s4, %s2
  $region1: #{blur.1} parent=0
    #allocation2 [shape = 'u8[65536]{0}', space=vmem, size = 0x10000, scoped, tag = 'input window, operand 0']
    #allocation3 [shape = 's32[2]{0}', space=sflag, size = 0x8, scoped, tag = 'scoped memory for blur.1']
    #allocation4 [shape = 's32[2]{0}', space=sflag, size = 0x8, scoped, tag = 'scoped memory for blur.1']
    #allocation5 [shape = 'u8[65536]{0}', space=vmem, size = 0x10000, scoped, tag = 'output window, operand 0']
    %6 = vsyncpa [#allocation3], 0
    %s7 = scalar_lea.sflag [#allocation3], 1
    %8 = vsyncpa %s7, 0
    %9 = vsyncpa [#allocation4], 0
    %s10 = scalar_lea.sflag [#allocation4], 1
    %11 = vsyncpa %s10, 0
    loop: start=0, step=1, limit=4
    $region2: #{blur.1} parent=1 // loop_pre_header
      _
    $region3: #{blur.1} parent=1 // loop_header
      %s13 = sphi 0, %s17
      %p14 = scmp.ge.s32.totalorder %s13, 4
      %s23 = sphi 0, %s25
      %s26 = sphi 0, %s23
      %s27 = sphi 0, %s26
      %s43 = sphi 0, %s27
      %s49 = sphi 0, %s51
      %s52 = sphi 0, %s49
      %s53 = sphi 0, %s52
      %s69 = sphi 0, %s53
    $region4: #{blur.1} parent=1 // loop_header_branch
      %16 = sbr.rel (%p14) target = $region8
    $region5: #{blur.1} parent=1 // loop_body
      %s18 = ssub.s32 %s13, 1
      %s19 = ssub.s32 %s13, 2
      %s20 = sadd.s32 %s13, 1
      %s21 = ssub.s32 %s13, %s20
      %p22 = scmp.eq.s32.totalorder %s21, 0
      %s24 = sadd.s32 %s23, 1
      %s25 = scalar_select %p22, %s23, %s24
      %p28 = pneg %p22
      %p29 = scmp.eq.s32.totalorder %s13, 1
      %p30 = por %p28, %p29
      %p31 = scmp.ne.s32.totalorder %s23, %s26
      %p32 = scmp.eq.s32.totalorder %s13, 0
      %p33 = por %p31, %p32
      %p34 = scmp.ne.s32.totalorder %s23, %s26
      %p35 = scmp.eq.s32.totalorder %s18, 1
      %p36 = por %p34, %p35
      %p37 = scmp.ne.s32.totalorder %s26, %s27
      %p38 = scmp.eq.s32.totalorder %s18, 0
      %p39 = por %p37, %p38
      %p40 = scmp.ne.s32.totalorder %s26, %s27
      %p41 = scmp.eq.s32.totalorder %s19, 1
      %p42 = por %p40, %p41
      %p44 = scmp.ne.s32.totalorder %s27, %s43
      %p45 = scmp.eq.s32.totalorder %s19, 0
      %p46 = por %p44, %p45
      %s47 = ssub.s32 %s13, %s20
      %p48 = scmp.eq.s32.totalorder %s47, 0
      %s50 = sadd.s32 %s49, 1
      %s51 = scalar_select %p48, %s49, %s50
      %p54 = pneg %p48
      %p55 = scmp.eq.s32.totalorder %s13, 1
      %p56 = por %p54, %p55
      %p57 = scmp.ne.s32.totalorder %s49, %s52
      %p58 = scmp.eq.s32.totalorder %s13, 0
      %p59 = por %p57, %p58
      %p60 = scmp.ne.s32.totalorder %s49, %s52
      %p61 = scmp.eq.s32.totalorder %s18, 1
      %p62 = por %p60, %p61
      %p63 = scmp.ne.s32.totalorder %s52, %s53
      %p64 = scmp.eq.s32.totalorder %s18, 0
      %p65 = por %p63, %p64
      %p66 = scmp.ne.s32.totalorder %s52, %s53
      %p67 = scmp.eq.s32.totalorder %s19, 1
      %p68 = por %p66, %p67
      %p70 = scmp.ne.s32.totalorder %s53, %s69
      %p71 = scmp.eq.s32.totalorder %s19, 0
      %p72 = por %p70, %p71
      %p73 = scmp.le.s32.totalorder 1, %s13
      %p74 = scmp.lt.s32.totalorder %s13, 3
      %p75 = pnand %p73, %p74
      %p76 = pneg %p75
      // Predicated region
      $region9: #{blur.1} parent=5 // pred_check
        _
      $region10: #{blur.1} parent=5 // pred_check_branch
        %78 = sbr.rel (%p75) target = $region12
      $region11: #{blur.1} parent=5 // pred_region
        %s79 = ssub.s32 %s13, 1
      $region12: #{blur.1} parent=5 // pred_fallthru
        _
      %p80 = scmp.lt.s32.totalorder %s13, 2
      // Predicated region
      $region13: #{blur.1} parent=5 // pred_check
        %p81 = pneg %p80
      $region14: #{blur.1} parent=5 // pred_check_branch
        %83 = sbr.rel (%p81) target = $region16
      $region15: #{blur.1} parent=5 // pred_region
        // Predicated region
        $region17: #{blur.1} parent=15 // pred_check
          %p84 = pneg %p33
        $region18: #{blur.1} parent=15 // pred_check_branch
          %86 = sbr.rel (%p84) target = $region20
        $region19: #{blur.1} parent=15 // pred_region
          %s87 = sand.u32 %s23, 1
          %s88 = scalar_lea.sflag [#allocation3], %s87
          %s89 = sand.u32 %s23, 1
          %s90 = smul.addr %s89, 64
          %s91 = scalar_lea.vmem [#allocation2], %s90
          %s92 = smul.u32 4, %s13
          %s94 = ssub.s32 1024, 1024
          %95 = vsyncadd %s88, %s94
          %s96 = smul.addr %s92, 2
          %s97 = smul.addr %s96, 128
          %s98 = scalar_lea.hbm %s0, %s97
          %s99 = sshll.u32 %s91, 4
          %s100 = int_to_ptr.vmem [resolvable:$true] %s99
          %105 = dma.hbm_to_vmem [thread:$0]  %s98, 1024, %s100, %s88, 128, 128, 8
        $region20: #{blur.1} parent=15 // pred_fallthru
          _
      $region16: #{blur.1} parent=5 // pred_fallthru
        _
      %p106 = scmp.le.s32.totalorder 1, %s13
      %p107 = scmp.lt.s32.totalorder %s13, 3
      %p108 = pnand %p106, %p107
      %p109 = pneg %p108
      // Predicated region
      $region21: #{blur.1} parent=5 // pred_check
        _
      $region22: #{blur.1} parent=5 // pred_check_branch
        %111 = sbr.rel (%p108) target = $region24
      $region23: #{blur.1} parent=5 // pred_region
        %s112 = ssub.s32 %s13, 1
        %s113 = sand.u32 %s26, 1
        %s114 = scalar_lea.sflag [#allocation3], %s113
        %s115 = sand.u32 %s26, 1
        %s116 = smul.addr %s115, 64
        %s117 = scalar_lea.vmem [#allocation2], %s116
        // Predicated region
        $region25: #{blur.1} parent=23 // pred_check
          %p118 = pneg %p39
        $region26: #{blur.1} parent=23 // pred_check_branch
          %120 = sbr.rel (%p118) target = $region28
        $region27: #{blur.1} parent=23 // pred_region
          %121 = dma.done %s114, 1024
        $region28: #{blur.1} parent=23 // pred_fallthru
          _
        %s122 = sand.u32 %s26, 1
        %s123 = scalar_lea.sflag [#allocation3], %s122
        %s124 = sand.u32 %s26, 1
        %s125 = smul.addr %s124, 64
        %s126 = scalar_lea.vmem [#allocation2], %s125
        %p127 = pneg %p39
        %p128 = pneg %p36
        %p129 = pneg %p65
        %p130 = pneg %p62
        %s131 = sand.u32 %s52, 1
        %s132 = scalar_lea.sflag [#allocation4], %s131
        %s133 = sand.u32 %s52, 1
        %s134 = smul.addr %s133, 64
        %s135 = scalar_lea.vmem [#allocation5], %s134
        %s136 = smul.u32 4, %s18
        %s137 = smul.u32 4, %s18
        %v138 = vld [vmem:[%s117] sm:$0xff]
        %v139 = vld [vmem:[%s117 + $0x8] sm:$0xff]
        %v140 = vld [vmem:[%s117 + $0x10] sm:$0xff]
        %v141 = vld [vmem:[%s117 + $0x18] sm:$0xff]
        %v142 = vld [vmem:[%s117 + $0x20] sm:$0xff]
        %v143 = vld [vmem:[%s117 + $0x28] sm:$0xff]
        %v144 = vld [vmem:[%s117 + $0x30] sm:$0xff]
        %v145 = vld [vmem:[%s117 + $0x38] sm:$0xff]
        %154 = vrot.lane.b32.xlu0 %v138, 1
        %v155 = vpop.permute.xlu0 %154
        %156 = vrot.lane.b32.xlu0 %v139, 1
        %v157 = vpop.permute.xlu0 %156
        %158 = vrot.lane.b32.xlu0 %v140, 1
        %v159 = vpop.permute.xlu0 %158
        %160 = vrot.lane.b32.xlu0 %v141, 1
        %v161 = vpop.permute.xlu0 %160
        %162 = vrot.lane.b32.xlu0 %v142, 1
        %v163 = vpop.permute.xlu0 %162
        %164 = vrot.lane.b32.xlu0 %v143, 1
        %v165 = vpop.permute.xlu0 %164
        %166 = vrot.lane.b32.xlu0 %v144, 1
        %v167 = vpop.permute.xlu0 %166
        %168 = vrot.lane.b32.xlu0 %v145, 1
        %v169 = vpop.permute.xlu0 %168
        %vm178 = vcmask 7168
        %v179 = vsel %vm178, 0.0, %v155
        %v180 = vsel %vm178, 0.0, %v157
        %v181 = vsel %vm178, 0.0, %v159
        %v182 = vsel %vm178, 0.0, %v161
        %v183 = vsel %vm178, 0.0, %v163
        %v184 = vsel %vm178, 0.0, %v165
        %v185 = vsel %vm178, 0.0, %v167
        %v186 = vsel %vm178, 0.0, %v169
        %187 = vrot.lane.b32.xlu0 %v138, 127
        %v188 = vpop.permute.xlu0 %187
        %189 = vrot.lane.b32.xlu0 %v139, 127
        %v190 = vpop.permute.xlu0 %189
        %191 = vrot.lane.b32.xlu0 %v140, 127
        %v192 = vpop.permute.xlu0 %191
        %193 = vrot.lane.b32.xlu0 %v141, 127
        %v194 = vpop.permute.xlu0 %193
        %195 = vrot.lane.b32.xlu0 %v142, 127
        %v196 = vpop.permute.xlu0 %195
        %197 = vrot.lane.b32.xlu0 %v143, 127
        %v198 = vpop.permute.xlu0 %197
        %199 = vrot.lane.b32.xlu0 %v144, 127
        %v200 = vpop.permute.xlu0 %199
        %201 = vrot.lane.b32.xlu0 %v145, 127
        %v202 = vpop.permute.xlu0 %201
        %vm211 = vcmask 121856
        %v212 = vsel %vm211, %v188, 0.0
        %v213 = vsel %vm211, %v190, 0.0
        %v214 = vsel %vm211, %v192, 0.0
        %v215 = vsel %vm211, %v194, 0.0
        %v216 = vsel %vm211, %v196, 0.0
        %v217 = vsel %vm211, %v198, 0.0
        %v218 = vsel %vm211, %v200, 0.0
        %v219 = vsel %vm211, %v202, 0.0
        %v220 = vmul.f32 %v138, 2.0
        %v221 = vmul.f32 %v139, 2.0
        %v222 = vmul.f32 %v140, 2.0
        %v223 = vmul.f32 %v141, 2.0
        %v224 = vmul.f32 %v142, 2.0
        %v225 = vmul.f32 %v143, 2.0
        %v226 = vmul.f32 %v144, 2.0
        %v227 = vmul.f32 %v145, 2.0
        %v228 = vadd.f32 %v179, %v220
        %v229 = vadd.f32 %v180, %v221
        %v230 = vadd.f32 %v181, %v222
        %v231 = vadd.f32 %v182, %v223
        %v232 = vadd.f32 %v183, %v224
        %v233 = vadd.f32 %v184, %v225
        %v234 = vadd.f32 %v185, %v226
        %v235 = vadd.f32 %v186, %v227
        %v236 = vadd.f32 %v228, %v212
        %v237 = vadd.f32 %v229, %v213
        %v238 = vadd.f32 %v230, %v214
        %v239 = vadd.f32 %v231, %v215
        %v240 = vadd.f32 %v232, %v216
        %v241 = vadd.f32 %v233, %v217
        %v242 = vadd.f32 %v234, %v218
        %v243 = vadd.f32 %v235, %v219
        %vm252 = vcmask 1040384
        %v253 = vrot.slane %v236, 7
        %v254 = vrot.slane %v237, 7
        %v255 = vsel %vm252, %v253, %v254
        %v256 = vrot.slane %v238, 7
        %v257 = vrot.slane %v239, 7
        %v258 = vsel %vm252, %v256, %v257
        %v259 = vrot.slane %v240, 7
        %v260 = vrot.slane %v241, 7
        %v261 = vsel %vm252, %v259, %v260
        %v262 = vrot.slane %v242, 7
        %v263 = vrot.slane %v243, 7
        %v264 = vsel %vm252, %v262, %v263
        %v273 = vsel %vm252, 0.0, %v253
        %v274 = vsel %vm252, 0.0, %v256
        %v275 = vsel %vm252, 0.0, %v259
        %v276 = vsel %vm252, 0.0, %v262
        %vm277 = vcmask 1046528
        %v278 = vrot.slane %v236, 1
        %v279 = vrot.slane %v237, 1
        %v280 = vsel %vm277, %v278, %v279
        %v281 = vrot.slane %v238, 1
        %v282 = vrot.slane %v239, 1
        %v283 = vsel %vm277, %v281, %v282
        %v284 = vrot.slane %v240, 1
        %v285 = vrot.slane %v241, 1
        %v286 = vsel %vm277, %v284, %v285
        %v287 = vrot.slane %v242, 1
        %v288 = vrot.slane %v243, 1
        %v289 = vsel %vm277, %v287, %v288
        %v298 = vsel %vm277, %v279, 0.0
        %v299 = vsel %vm277, %v282, 0.0
        %v300 = vsel %vm277, %v285, 0.0
        %v301 = vsel %vm277, %v288, 0.0
        %v302 = vmul.f32 %v236, 2.0
        %v303 = vmul.f32 %v237, 2.0
        %v304 = vmul.f32 %v238, 2.0
        %v305 = vmul.f32 %v239, 2.0
        %v306 = vmul.f32 %v240, 2.0
        %v307 = vmul.f32 %v241, 2.0
        %v308 = vmul.f32 %v242, 2.0
        %v309 = vmul.f32 %v243, 2.0
        %v310 = vadd.f32 %v273, %v302
        %v311 = vadd.f32 %v255, %v303
        %v312 = vadd.f32 %v274, %v304
        %v313 = vadd.f32 %v258, %v305
        %v314 = vadd.f32 %v275, %v306
        %v315 = vadd.f32 %v261, %v307
        %v316 = vadd.f32 %v276, %v308
        %v317 = vadd.f32 %v264, %v309
        %v318 = vadd.f32 %v310, %v280
        %v319 = vadd.f32 %v311, %v298
        %v320 = vadd.f32 %v312, %v283
        %v321 = vadd.f32 %v313, %v299
        %v322 = vadd.f32 %v314, %v286
        %v323 = vadd.f32 %v315, %v300
        %v324 = vadd.f32 %v316, %v289
        %v325 = vadd.f32 %v317, %v301
        %v326 = vmul.f32 %v318, 0.0625
        %v327 = vmul.f32 %v319, 0.0625
        %v328 = vmul.f32 %v320, 0.0625
        %v329 = vmul.f32 %v321, 0.0625
        %v330 = vmul.f32 %v322, 0.0625
        %v331 = vmul.f32 %v323, 0.0625
        %v332 = vmul.f32 %v324, 0.0625
        %v333 = vmul.f32 %v325, 0.0625
        %vm334 = vcmask 130048
        %335 = vst.msk [vmem:[%s135] sm:$0xff] %vm334, %v326
        %336 = vst.msk [vmem:[%s135 + $0x8] sm:$0xff] %vm334, %v327
        %337 = vst.msk [vmem:[%s135 + $0x10] sm:$0xff] %vm334, %v328
        %338 = vst.msk [vmem:[%s135 + $0x18] sm:$0xff] %vm334, %v329
        %339 = vst.msk [vmem:[%s135 + $0x20] sm:$0xff] %vm334, %v330
        %340 = vst.msk [vmem:[%s135 + $0x28] sm:$0xff] %vm334, %v331
        %341 = vst.msk [vmem:[%s135 + $0x30] sm:$0xff] %vm334, %v332
        %342 = vst.msk [vmem:[%s135 + $0x38] sm:$0xff] %vm334, %v333
        %s343 = sand.u32 %s52, 1
        %s344 = scalar_lea.sflag [#allocation4], %s343
        %s345 = sand.u32 %s52, 1
        %s346 = smul.addr %s345, 64
        %s347 = scalar_lea.vmem [#allocation5], %s346
        // Predicated region
        $region29: #{blur.1} parent=23 // pred_check
          %p348 = pneg %p62
        $region30: #{blur.1} parent=23 // pred_check_branch
          %350 = sbr.rel (%p348) target = $region32
        $region31: #{blur.1} parent=23 // pred_region
          %s351 = smul.u32 4, %s18
          %s353 = ssub.s32 1024, 1024
          %354 = vsyncadd %s344, %s353
          %s355 = smul.addr %s351, 2
          %s356 = smul.addr %s355, 128
          %s357 = scalar_lea.hbm %s1, %s356
          %s358 = sshll.u32 %s347, 4
          %s359 = int_to_ptr.vmem [resolvable:$true] %s358
          %364 = dma.vmem_to_hbm [thread:$0]  %s359, 1024, %s357, %s344, 128, 128, 8
        $region32: #{blur.1} parent=23 // pred_fallthru
          _
      $region24: #{blur.1} parent=5 // pred_fallthru
        _
      %p365 = scmp.le.s32.totalorder 2, %s13
      // Predicated region
      $region33: #{blur.1} parent=5 // pred_check
        %p366 = pneg %p365
      $region34: #{blur.1} parent=5 // pred_check_branch
        %368 = sbr.rel (%p366) target = $region36
      $region35: #{blur.1} parent=5 // pred_region
        %s369 = ssub.s32 %s13, 2
        // Predicated region
        $region37: #{blur.1} parent=35 // pred_check
          %p370 = pneg %p68
        $region38: #{blur.1} parent=35 // pred_check_branch
          %372 = sbr.rel (%p370) target = $region40
        $region39: #{blur.1} parent=35 // pred_region
          %s373 = sand.u32 %s53, 1
          %s374 = scalar_lea.sflag [#allocation4], %s373
          %s375 = sand.u32 %s53, 1
          %s376 = smul.addr %s375, 64
          %s377 = scalar_lea.vmem [#allocation5], %s376
          %378 = dma.done %s374, 1024
        $region40: #{blur.1} parent=35 // pred_fallthru
          _
      $region36: #{blur.1} parent=5 // pred_fallthru
        _
    $region6: #{blur.1} parent=1 // loop_footer
      %s17 = sadd.s32 1, %s13
    $region7: #{blur.1} parent=1 // loop_footer_branch
      %12 = sbr.rel target = $region3
    $region8: #{blur.1} parent=1 // loop_exit
      _
    %379 = vsyncpa [#allocation3], 1
    %s380 = scalar_lea.sflag [#allocation3], 1
    %381 = vsyncpa %s380, 1
    %382 = vsyncpa [#allocation4], 1
    %s383 = scalar_lea.sflag [#allocation4], 1
    %384 = vsyncpa %s383, 1

</llo_original>
